<compile_context>
chip_gen: v7x
topology: tpu7x:2x2x1
jax: 0.10.0
libtpu: 0.0.40
codegen_flags: <defaults>
</compile_context>

<pallas_src>
import math
from functools import partial

import numpy as np
import jax
import jax.numpy as jnp
from jax import lax
from jax.experimental import pallas as pl
from jax.experimental.pallas import tpu as pltpu


def _round_up(x, m):
    return ((x + m - 1) // m) * m


def _angular_supcon_kernel(rowlab_ref, collab_ref, anchor_ref, contrast_ref,
                           out_ref, denom_acc, pos_dot_acc, pos_cnt_acc, *,
                           logit_scale, loss_scale, margin, apply_margin,
                           n_rows, n_cols, matmul_dtype):
    i = pl.program_id(0)                      # anchor-row tile index   (parallel)
    j = pl.program_id(1)                      # contrast-col tile index (arbitrary, innermost)

    @pl.when(j == 0)
    def _init():
        denom_acc[...] = jnp.zeros_like(denom_acc)
        pos_dot_acc[...] = jnp.zeros_like(pos_dot_acc)
        pos_cnt_acc[...] = jnp.zeros_like(pos_cnt_acc)

    a = anchor_ref[...]                       # (tA, D), already L2-normalized f32
    c = contrast_ref[...]                     # (tN, D), already L2-normalized f32
    tA, tN = a.shape[0], c.shape[0]

    # cosine similarities on the MXU: (tA, D) . (tN, D)^T
    cos = lax.dot_general(a.astype(matmul_dtype), c.astype(matmul_dtype),
                          (((1,), (1,)), ((), ())),
                          preferred_element_type=jnp.float32)
    cos = cos * (1.0 - 1e-05)

    # acos(x) = atan2(sqrt((1-x)(1+x)), x)   (1 sqrt + 1 atan2; cancellation-free)
    angle = jnp.arctan2(jnp.sqrt((1.0 - cos) * (1.0 + cos)), cos)

    # in-kernel masks: self exclusion (global row != global col) and column validity
    # (col < n_cols handles the padded contrast rows) — no [A,N] mask traffic from HBM.
    row_gid = i * tA + lax.broadcasted_iota(jnp.int32, (tA, tN), 0)
    col_gid = j * tN + lax.broadcasted_iota(jnp.int32, (tA, tN), 1)
    valid = jnp.logical_and(row_gid != col_gid, col_gid < n_cols)

    # positive mask from label equality ((tA,1) vs (1,tN) broadcast), self/padding removed
    pos = jnp.logical_and(rowlab_ref[...] == collab_ref[...], valid)

    if apply_margin:                          # specialized away when margin == 1.0
        angle = jnp.where(pos, angle * margin, angle)

    # logits = -2*angle/(margin*pi*T).  The reference's "+1/T" shift and row-max
    # subtraction cancel in log-softmax; logits <= 0 so exp() is stable without them.
    logits = angle * logit_scale

    pos_f = pos.astype(jnp.float32)
    exp_l = jnp.where(valid, jnp.exp(logits), 0.0)

    denom_acc[...] += jnp.sum(exp_l, axis=-1, keepdims=True)
    pos_dot_acc[...] += jnp.sum(pos_f * logits, axis=-1, keepdims=True)
    pos_cnt_acc[...] += jnp.sum(pos_f, axis=-1, keepdims=True)

    @pl.when(j == pl.num_programs(1) - 1)
    def _finalize():
        cnt = pos_cnt_acc[...]
        # sum_pos(log_prob) = sum_pos(logits) - cnt * log(sum(exp_logits))
        mean_log_prob_pos = (pos_dot_acc[...] - cnt * jnp.log(denom_acc[...])) / cnt
        loss_rows = loss_scale * mean_log_prob_pos
        row_ok = (i * tA + lax.broadcasted_iota(jnp.int32, (tA, 1), 0)) < n_rows
        out_ref[...] = jnp.where(row_ok, loss_rows, 0.0)   # padded rows contribute 0


def angular_supcon_loss(features, labels=None, mask=None, *,
                        temperature=0.07, contrast_mode="all",
                        base_temperature=0.07, margin=1.0,
                        matmul_dtype=jnp.float32):
    """Forward pass of AngularSupConLoss. Returns a scalar loss."""
    if features.ndim < 3:
        raise ValueError("`features` needs to be [bsz, n_views, ...]")
    if features.ndim > 3:
        features = features.reshape(features.shape[0], features.shape[1], -1)
    bsz, n_views, dim = features.shape

    if labels is not None and mask is not None:
        raise ValueError("Cannot define both `labels` and `mask`")
    if mask is not None:
        # TODO(synk): arbitrary user-provided [bsz, bsz] masks are not expressible as
        # label equality; this fast path only covers the labels / SimCLR cases.
        raise NotImplementedError("explicit `mask` argument is not supported by the Pallas path")
    if labels is None:
        labels = jnp.arange(bsz, dtype=jnp.int32)       # SimCLR: eye mask == arange-label equality
    else:
        labels = jnp.asarray(labels).reshape(-1).astype(jnp.int32)
        if labels.shape[0] != bsz:
            raise ValueError("Num of labels does not match num of features")

    contrast_count = n_views
    # torch.cat(torch.unbind(features, dim=1), dim=0)  -> view-major stacking
    contrast_feature = jnp.transpose(features, (1, 0, 2)).reshape(n_views * bsz, dim)
    contrast_feature = contrast_feature.astype(jnp.float32)
    # L2-normalize ONCE in the wrapper (torch F.normalize, eps=1e-12).
    contrast_n = contrast_feature / jnp.maximum(
        jnp.linalg.norm(contrast_feature, axis=-1, keepdims=True), 1e-12)

    if contrast_mode == "one":
        anchor_n = contrast_n[:bsz]                     # rows of view 0 == features[:, 0]
        anchor_count = 1
    elif contrast_mode == "all":
        anchor_n = contrast_n                           # same buffer, reused
        anchor_count = contrast_count
    else:
        raise ValueError(f"Unknown mode: {contrast_mode}")

    A = anchor_count * bsz
    N = contrast_count * bsz
    row_labels = jnp.tile(labels, anchor_count)         # label of global anchor row
    col_labels = jnp.tile(labels, contrast_count)       # label of global contrast col

    # Tile sizes (respect the (8, 128) constraint); pad A/N up to whole tiles.
    tA = min(128, _round_up(A, 8))
    A_pad = _round_up(A, tA)
    tN = min(512, _round_up(N, 128))
    N_pad = _round_up(N, tN)

    anchor_p = jnp.pad(anchor_n, ((0, A_pad - A), (0, 0)))
    contrast_p = jnp.pad(contrast_n, ((0, N_pad - N), (0, 0)))
    row_lab_p = jnp.pad(row_labels, (0, A_pad - A), constant_values=-1).reshape(A_pad, 1)
    col_lab_p = jnp.pad(col_labels, (0, N_pad - N), constant_values=-1).reshape(1, N_pad)

    grid = (A_pad // tA, N_pad // tN)

    kernel = partial(
        _angular_supcon_kernel,
        logit_scale=-2.0 / (float(margin) * math.pi * float(temperature)),
        loss_scale=-(float(temperature) / float(base_temperature)),
        margin=float(margin),
        apply_margin=(float(margin) != 1.0),
        n_rows=A, n_cols=N,
        matmul_dtype=matmul_dtype)

    row_losses = pl.pallas_call(
        kernel,
        out_shape=jax.ShapeDtypeStruct((A_pad, 1), jnp.float32),
        grid_spec=pltpu.PrefetchScalarGridSpec(
            num_scalar_prefetch=0,
            grid=grid,
            in_specs=[
                pl.BlockSpec((tA, 1), lambda i, j: (i, 0)),     # row labels
                pl.BlockSpec((1, tN), lambda i, j: (0, j)),     # col labels
                pl.BlockSpec((tA, dim), lambda i, j: (i, 0)),   # normalized anchors
                pl.BlockSpec((tN, dim), lambda i, j: (j, 0)),   # normalized contrasts
            ],
            out_specs=pl.BlockSpec((tA, 1), lambda i, j: (i, 0)),
            scratch_shapes=[pltpu.VMEM((tA, 1), jnp.float32)] * 3,
        ),
        compiler_params=pltpu.CompilerParams(
            dimension_semantics=("parallel", "arbitrary"),
            vmem_limit_bytes=32 * 1024 * 1024,
        ),
        cost_estimate=pl.CostEstimate(
            flops=2 * A_pad * N_pad * dim,
            transcendentals=3 * A_pad * N_pad,
            bytes_accessed=4 * (A_pad * dim + grid[0] * N_pad * dim + A_pad + N_pad),
        ),
    )(row_lab_p, col_lab_p, anchor_p, contrast_p)

    # loss.view(anchor_count, batch_size).mean() == mean over all A anchor rows
    return jnp.sum(row_losses) / A


def _reference_loss(features, labels=None, *, temperature=0.07, base_temperature=0.07,
                    margin=1.0, contrast_mode="all"):
    """Pure-JAX transcription of the PyTorch forward (for validation)."""
    bsz, n_views, dim = features.shape
    if labels is None:
        mask = jnp.eye(bsz, dtype=jnp.float32)
    else:
        labels = labels.reshape(-1, 1)
        mask = (labels == labels.T).astype(jnp.float32)
    contrast_feature = jnp.transpose(features, (1, 0, 2)).reshape(n_views * bsz, dim)
    if contrast_mode == "one":
        anchor_feature, anchor_count = features[:, 0], 1
    else:
        anchor_feature, anchor_count = contrast_feature, n_views
    A = anchor_count * bsz
    N = n_views * bsz
    mask = jnp.tile(mask, (anchor_count, n_views))
    logits_mask = jnp.ones((A, N), jnp.float32).at[jnp.arange(A), jnp.arange(A)].set(0.0)
    mask = mask * logits_mask

    def _norm(x):
        return x / jnp.maximum(jnp.linalg.norm(x, axis=1, keepdims=True), 1e-12)

    cos = _norm(anchor_feature) @ _norm(contrast_feature).T
    cos = cos * (1.0 - 1e-05)
    angle = jnp.arccos(cos)
    angle = jnp.where(mask == 1.0, angle * margin, angle)
    logits = ((-2.0 / (margin * jnp.pi)) * angle + 1.0) / temperature
    logits = logits - jnp.max(logits, axis=1, keepdims=True)
    exp_logits = jnp.exp(logits) * logits_mask
    log_prob = logits - jnp.log(jnp.sum(exp_logits, axis=1, keepdims=True))
    mean_log_prob_pos = jnp.sum(mask * log_prob, axis=1) / jnp.sum(mask, axis=1)
    loss = -(temperature / base_temperature) * mean_log_prob_pos
    return jnp.mean(loss)


if __name__ == "__main__":
    key = jax.random.PRNGKey(0)
    bsz, n_views, dim = 4, 2, 32
    features = jax.random.normal(key, (bsz, n_views, dim), dtype=jnp.float32)
    labels = jnp.array([0, 1, 0, 1], dtype=jnp.int32)

    # Supervised case, default margin.
    loss = jax.block_until_ready(angular_supcon_loss(features, labels=labels))
    ref = jax.block_until_ready(_reference_loss(features, labels))
    np.testing.assert_allclose(np.asarray(loss), np.asarray(ref), rtol=1e-3, atol=1e-3)

    # SimCLR case (labels=None) with a non-unit margin.
    loss2 = jax.block_until_ready(angular_supcon_loss(features, margin=0.5))
    ref2 = jax.block_until_ready(_reference_loss(features, None, margin=0.5))
    np.testing.assert_allclose(np.asarray(loss2), np.asarray(ref2), rtol=1e-3, atol=1e-3)

    print("KERNEL_OK")
</pallas_src>

<mosaic_0001>
module attributes {stable_mosaic.version = 11 : i64} {
  func.func @_angular_supcon_kernel(%arg0: i32, %arg1: i32, %arg2: memref<8x1xi32, #tpu.memory_space<vmem>>, %arg3: memref<1x128xi32, #tpu.memory_space<vmem>>, %arg4: memref<8x32xf32, #tpu.memory_space<vmem>>, %arg5: memref<128x32xf32, #tpu.memory_space<vmem>>, %arg6: memref<8x1xf32, #tpu.memory_space<vmem>>, %arg7: memref<8x1xf32, #tpu.memory_space<vmem>>, %arg8: memref<8x1xf32, #tpu.memory_space<vmem>>, %arg9: memref<8x1xf32, #tpu.memory_space<vmem>>) attributes {dimension_semantics = [#tpu.dimension_semantics<parallel>, #tpu.dimension_semantics<arbitrary>], iteration_bounds = array<i64: 1, 1>, scalar_prefetch = 0 : i64, scratch_operands = 3 : i64, tpu.core_type = #tpu.core_type<tc>, window_params = [{transform_indices = @transform_0, window_bounds = array<i64: 8, 1>}, {transform_indices = @transform_1, window_bounds = array<i64: 1, 128>}, {transform_indices = @transform_2, window_bounds = array<i64: 8, 32>}, {transform_indices = @transform_3, window_bounds = array<i64: 128, 32>}, {transform_indices = @transform_4, window_bounds = array<i64: 8, 1>}]} {
    %c0_i32 = arith.constant 0 : i32
    %0 = arith.cmpi eq, %arg1, %c0_i32 : i32
    %1 = arith.extui %0 : i1 to i32
    %c0_i32_0 = arith.constant 0 : i32
    %2 = arith.cmpi ne, %1, %c0_i32_0 : i32
    scf.if %2 {
      %cst_31 = arith.constant 0.000000e+00 : f32
      %59 = vector.broadcast %cst_31 : f32 to vector<8x1xf32>
      %c0_32 = arith.constant 0 : index
      %c0_33 = arith.constant 0 : index
      %60 = vector.load %arg7[%c0_32, %c0_33] : memref<8x1xf32, #tpu.memory_space<vmem>>, vector<8x1xf32>
      tpu.vector_store %arg7[%c0_32, %c0_33], %59 {strides = array<i32>} : memref<8x1xf32, #tpu.memory_space<vmem>>, vector<8x1xf32>,
      %cst_34 = arith.constant 0.000000e+00 : f32
      %61 = vector.broadcast %cst_34 : f32 to vector<8x1xf32>
      %c0_35 = arith.constant 0 : index
      %c0_36 = arith.constant 0 : index
      %62 = vector.load %arg8[%c0_35, %c0_36] : memref<8x1xf32, #tpu.memory_space<vmem>>, vector<8x1xf32>
      tpu.vector_store %arg8[%c0_35, %c0_36], %61 {strides = array<i32>} : memref<8x1xf32, #tpu.memory_space<vmem>>, vector<8x1xf32>,
      %cst_37 = arith.constant 0.000000e+00 : f32
      %63 = vector.broadcast %cst_37 : f32 to vector<8x1xf32>
      %c0_38 = arith.constant 0 : index
      %c0_39 = arith.constant 0 : index
      %64 = vector.load %arg9[%c0_38, %c0_39] : memref<8x1xf32, #tpu.memory_space<vmem>>, vector<8x1xf32>
      tpu.vector_store %arg9[%c0_38, %c0_39], %63 {strides = array<i32>} : memref<8x1xf32, #tpu.memory_space<vmem>>, vector<8x1xf32>,
    } else {
    }
    %c0 = arith.constant 0 : index
    %c0_1 = arith.constant 0 : index
    %3 = vector.load %arg4[%c0, %c0_1] : memref<8x32xf32, #tpu.memory_space<vmem>>, vector<8x32xf32>
    %c0_2 = arith.constant 0 : index
    %c0_3 = arith.constant 0 : index
    %4 = vector.load %arg5[%c0_2, %c0_3] : memref<128x32xf32, #tpu.memory_space<vmem>>, vector<128x32xf32>
    %cst = arith.constant dense<0.000000e+00> : vector<8x128xf32>
    %5 = tpu.matmul %3, %4, %cst {dimension_numbers = #tpu.dot_dimension_numbers<[1], [1], [0], [0], [0, 0, 1, 0], [], []>} : vector<8x32xf32>, vector<128x32xf32>, vector<8x128xf32> -> vector<8x128xf32>
    %cst_4 = arith.constant 0.999989986 : f32
    %6 = vector.broadcast %cst_4 : f32 to vector<8x128xf32>
    %7 = arith.mulf %5, %6 : vector<8x128xf32>
    %cst_5 = arith.constant 1.000000e+00 : f32
    %8 = vector.broadcast %cst_5 : f32 to vector<8x128xf32>
    %9 = arith.subf %8, %7 : vector<8x128xf32>
    %cst_6 = arith.constant 1.000000e+00 : f32
    %10 = vector.broadcast %cst_6 : f32 to vector<8x128xf32>
    %11 = arith.addf %10, %7 : vector<8x128xf32>
    %12 = arith.mulf %9, %11 : vector<8x128xf32>
    %13 = math.sqrt %12 : vector<8x128xf32>
    %14 = math.atan2 %13, %7 : vector<8x128xf32>
    %c8_i32 = arith.constant 8 : i32
    %15 = arith.muli %arg0, %c8_i32 : i32
    %16 = tpu.iota {dimensions = array<i32: 0>} : vector<8x128xi32>
    %17 = vector.broadcast %15 : i32 to vector<8x128xi32>
    %18 = arith.addi %17, %16 : vector<8x128xi32>
    %c128_i32 = arith.constant 128 : i32
    %19 = arith.muli %arg1, %c128_i32 : i32
    %20 = tpu.iota {dimensions = array<i32: 1>} : vector<8x128xi32>
    %21 = vector.broadcast %19 : i32 to vector<8x128xi32>
    %22 = arith.addi %21, %20 : vector<8x128xi32>
    %23 = arith.cmpi ne, %18, %22 : vector<8x128xi32>
    %c8_i32_7 = arith.constant 8 : i32
    %24 = vector.broadcast %c8_i32_7 : i32 to vector<8x128xi32>
    %25 = arith.cmpi slt, %22, %24 : vector<8x128xi32>
    %26 = arith.andi %23, %25 : vector<8x128xi1>
    %c0_8 = arith.constant 0 : index
    %c0_9 = arith.constant 0 : index
    %27 = vector.load %arg2[%c0_8, %c0_9] : memref<8x1xi32, #tpu.memory_space<vmem>>, vector<8x1xi32>
    %c0_10 = arith.constant 0 : index
    %c0_11 = arith.constant 0 : index
    %28 = vector.load %arg3[%c0_10, %c0_11] : memref<1x128xi32, #tpu.memory_space<vmem>>, vector<1x128xi32>
    %29 = vector.broadcast %27 : vector<8x1xi32> to vector<8x128xi32>
    %30 = vector.broadcast %28 : vector<1x128xi32> to vector<8x128xi32>
    %31 = arith.cmpi eq, %29, %30 : vector<8x128xi32>
    %32 = arith.andi %31, %26 : vector<8x128xi1>
    %cst_12 = arith.constant -9.09456825 : f32
    %33 = vector.broadcast %cst_12 : f32 to vector<8x128xf32>
    %34 = arith.mulf %14, %33 : vector<8x128xf32>
    %35 = arith.extui %32 : vector<8x128xi1> to vector<8x128xi32>
    %36 = arith.sitofp %35 : vector<8x128xi32> to vector<8x128xf32>
    %37 = math.exp %34 : vector<8x128xf32>
    %cst_13 = arith.constant 0.000000e+00 : f32
    %38 = vector.broadcast %cst_13 : f32 to vector<8x128xf32>
    %39 = arith.select %26, %37, %38 : vector<8x128xi1>, vector<8x128xf32>
    %c0_14 = arith.constant 0 : index
    %c0_15 = arith.constant 0 : index
    %40 = vector.load %arg7[%c0_14, %c0_15] : memref<8x1xf32, #tpu.memory_space<vmem>>, vector<8x1xf32>
    %cst_16 = arith.constant dense<0.000000e+00> : vector<8xf32>
    %41 = vector.multi_reduction <add>, %39, %cst_16 [1] : vector<8x128xf32> to vector<8xf32>
    %42 = vector.shape_cast %41 : vector<8xf32> to vector<8x1xf32>
    %43 = arith.addf %40, %42 : vector<8x1xf32>
    %c0_17 = arith.constant 0 : index
    %c0_18 = arith.constant 0 : index
    %44 = vector.load %arg7[%c0_17, %c0_18] : memref<8x1xf32, #tpu.memory_space<vmem>>, vector<8x1xf32>
    tpu.vector_store %arg7[%c0_17, %c0_18], %43 {strides = array<i32>} : memref<8x1xf32, #tpu.memory_space<vmem>>, vector<8x1xf32>,
    %c0_19 = arith.constant 0 : index
    %c0_20 = arith.constant 0 : index
    %45 = vector.load %arg8[%c0_19, %c0_20] : memref<8x1xf32, #tpu.memory_space<vmem>>, vector<8x1xf32>
    %46 = arith.mulf %36, %34 : vector<8x128xf32>
    %cst_21 = arith.constant dense<0.000000e+00> : vector<8xf32>
    %47 = vector.multi_reduction <add>, %46, %cst_21 [1] : vector<8x128xf32> to vector<8xf32>
    %48 = vector.shape_cast %47 : vector<8xf32> to vector<8x1xf32>
    %49 = arith.addf %45, %48 : vector<8x1xf32>
    %c0_22 = arith.constant 0 : index
    %c0_23 = arith.constant 0 : index
    %50 = vector.load %arg8[%c0_22, %c0_23] : memref<8x1xf32, #tpu.memory_space<vmem>>, vector<8x1xf32>
    tpu.vector_store %arg8[%c0_22, %c0_23], %49 {strides = array<i32>} : memref<8x1xf32, #tpu.memory_space<vmem>>, vector<8x1xf32>,
    %c0_24 = arith.constant 0 : index
    %c0_25 = arith.constant 0 : index
    %51 = vector.load %arg9[%c0_24, %c0_25] : memref<8x1xf32, #tpu.memory_space<vmem>>, vector<8x1xf32>
    %cst_26 = arith.constant dense<0.000000e+00> : vector<8xf32>
    %52 = vector.multi_reduction <add>, %36, %cst_26 [1] : vector<8x128xf32> to vector<8xf32>
    %53 = vector.shape_cast %52 : vector<8xf32> to vector<8x1xf32>
    %54 = arith.addf %51, %53 : vector<8x1xf32>
    %c0_27 = arith.constant 0 : index
    %c0_28 = arith.constant 0 : index
    %55 = vector.load %arg9[%c0_27, %c0_28] : memref<8x1xf32, #tpu.memory_space<vmem>>, vector<8x1xf32>
    tpu.vector_store %arg9[%c0_27, %c0_28], %54 {strides = array<i32>} : memref<8x1xf32, #tpu.memory_space<vmem>>, vector<8x1xf32>,
    %c0_i32_29 = arith.constant 0 : i32
    %56 = arith.cmpi eq, %arg1, %c0_i32_29 : i32
    %57 = arith.extui %56 : i1 to i32
    %c0_i32_30 = arith.constant 0 : i32
    %58 = arith.cmpi ne, %57, %c0_i32_30 : i32
    scf.if %58 {
      %c0_31 = arith.constant 0 : index
      %c0_32 = arith.constant 0 : index
      %59 = vector.load %arg9[%c0_31, %c0_32] : memref<8x1xf32, #tpu.memory_space<vmem>>, vector<8x1xf32>
      %c0_33 = arith.constant 0 : index
      %c0_34 = arith.constant 0 : index
      %60 = vector.load %arg8[%c0_33, %c0_34] : memref<8x1xf32, #tpu.memory_space<vmem>>, vector<8x1xf32>
      %c0_35 = arith.constant 0 : index
      %c0_36 = arith.constant 0 : index
      %61 = vector.load %arg7[%c0_35, %c0_36] : memref<8x1xf32, #tpu.memory_space<vmem>>, vector<8x1xf32>
      %62 = math.log %61 : vector<8x1xf32>
      %63 = arith.mulf %59, %62 : vector<8x1xf32>
      %64 = arith.subf %60, %63 : vector<8x1xf32>
      %65 = arith.divf %64, %59 : vector<8x1xf32>
      %cst_37 = arith.constant -1.000000e+00 : f32
      %66 = vector.broadcast %cst_37 : f32 to vector<8x1xf32>
      %67 = arith.mulf %66, %65 : vector<8x1xf32>
      %c8_i32_38 = arith.constant 8 : i32
      %68 = arith.muli %arg0, %c8_i32_38 : i32
      %69 = tpu.iota {dimensions = array<i32: 0>} : vector<8x1xi32>
      %70 = vector.broadcast %68 : i32 to vector<8x1xi32>
      %71 = arith.addi %70, %69 : vector<8x1xi32>
      %c8_i32_39 = arith.constant 8 : i32
      %72 = vector.broadcast %c8_i32_39 : i32 to vector<8x1xi32>
      %73 = arith.cmpi slt, %71, %72 : vector<8x1xi32>
      %cst_40 = arith.constant 0.000000e+00 : f32
      %74 = vector.broadcast %cst_40 : f32 to vector<8x1xf32>
      %75 = arith.select %73, %67, %74 : vector<8x1xi1>, vector<8x1xf32>
      %c0_41 = arith.constant 0 : index
      %c0_42 = arith.constant 0 : index
      %76 = vector.load %arg6[%c0_41, %c0_42] : memref<8x1xf32, #tpu.memory_space<vmem>>, vector<8x1xf32>
      tpu.vector_store %arg6[%c0_41, %c0_42], %75 {strides = array<i32>} : memref<8x1xf32, #tpu.memory_space<vmem>>, vector<8x1xf32>,
    } else {
    }
    return
  }
  func.func @transform_0(%arg0: i32, %arg1: i32) -> (i32, i32) {
    %c0_i32 = arith.constant 0 : i32
    %c0_i32_0 = arith.constant 0 : i32
    return %arg0, %c0_i32 : i32, i32
  }
  func.func @transform_1(%arg0: i32, %arg1: i32) -> (i32, i32) {
    %c0_i32 = arith.constant 0 : i32
    %c0_i32_0 = arith.constant 0 : i32
    return %c0_i32, %arg1 : i32, i32
  }
  func.func @transform_2(%arg0: i32, %arg1: i32) -> (i32, i32) {
    %c0_i32 = arith.constant 0 : i32
    %c0_i32_0 = arith.constant 0 : i32
    return %arg0, %c0_i32 : i32, i32
  }
  func.func @transform_3(%arg0: i32, %arg1: i32) -> (i32, i32) {
    %c0_i32 = arith.constant 0 : i32
    %c0_i32_0 = arith.constant 0 : i32
    return %arg1, %c0_i32 : i32, i32
  }
  func.func @transform_4(%arg0: i32, %arg1: i32) -> (i32, i32) {
    %c0_i32 = arith.constant 0 : i32
    %c0_i32_0 = arith.constant 0 : i32
    return %arg0, %c0_i32 : i32, i32
  }
}

</mosaic_0001>

<llo_original>
// kernel: tpu_custom_call.1
$region0: #{tpu_custom_call.1}
  #allocation0 [shape = 'u32[]', space=smem, size = 0x4, offset = 0x4, fixed_abs, tag = 'smem constant byte address 0x4 - core index']
  #allocation1 [shape = 'u32[144,128]{1,0:T(1,128)}', space=vmem, size = 0x12000, scoped, tag = 'internal scratch']
  #allocation2 [shape = 'f32[8,1]{1,0:T(8,128)}', space=vmem, size = 0x1000, scoped, tag = 'scratch operand']
  #allocation3 [shape = 'f32[8,1]{1,0:T(8,128)}', space=vmem, size = 0x1000, scoped, tag = 'scratch operand']
  #allocation4 [shape = 'f32[8,1]{1,0:T(8,128)}', space=vmem, size = 0x1000, scoped, tag = 'scratch operand']
  %s0 = inlined_call_operand.vmem [shape: s32[8,1], index: 0, kind: input, shape index: {}]
  %s1 = inlined_call_operand.vmem [shape: s32[1,128], index: 1, kind: input, shape index: {}]
  %s2 = inlined_call_operand.vmem [shape: f32[8,32], index: 2, kind: input, shape index: {}]
  %s3 = inlined_call_operand.vmem [shape: f32[128,32], index: 3, kind: input, shape index: {}]
  %s4 = inlined_call_operand.vmem [shape: f32[8,1], index: 4, kind: output, shape index: {}]
  %s5 = sld [smem:[#allocation0]]
  $region34: #{tpu_custom_call.1} parent=0
    _
  %s7 = ssub.s32 1, %s5
  %s8 = scalar_select 0, %s7, %s5
  // Predicated region
  $region2: #{tpu_custom_call.1} parent=0 // pred_check
    _
  $region3: #{tpu_custom_call.1} parent=0 // pred_check_branch
    %10 = sbr.rel (0) target = $region5
  $region4: #{tpu_custom_call.1} parent=0 // pred_region
    _
  $region5: #{tpu_custom_call.1} parent=0 // pred_fallthru
    _
  // Predicated region
  $region6: #{tpu_custom_call.1} parent=0 // pred_check
    _
  $region7: #{tpu_custom_call.1} parent=0 // pred_check_branch
    %12 = sbr.rel (0) target = $region9
  $region8: #{tpu_custom_call.1} parent=0 // pred_region
    _
  $region9: #{tpu_custom_call.1} parent=0 // pred_fallthru
    _
  // Predicated region
  $region10: #{tpu_custom_call.1} parent=0 // pred_check
    _
  $region11: #{tpu_custom_call.1} parent=0 // pred_check_branch
    %14 = sbr.rel (0) target = $region13
  $region12: #{tpu_custom_call.1} parent=0 // pred_region
    _
  $region13: #{tpu_custom_call.1} parent=0 // pred_fallthru
    _
  // Predicated region
  $region14: #{tpu_custom_call.1} parent=0 // pred_check
    _
  $region15: #{tpu_custom_call.1} parent=0 // pred_check_branch
    %16 = sbr.rel (0) target = $region17
  $region16: #{tpu_custom_call.1} parent=0 // pred_region
    _
  $region17: #{tpu_custom_call.1} parent=0 // pred_fallthru
    _
  %p17 = scmp.eq.s32.totalorder 0, 0
  // Predicated region
  $region18: #{tpu_custom_call.1} parent=0 // pred_check
    %p18 = pneg %p17
  $region19: #{tpu_custom_call.1} parent=0 // pred_check_branch
    %20 = sbr.rel (%p18) target = $region21
  $region20: #{tpu_custom_call.1} parent=0 // pred_region
    %vm21 = vcmask 7168
    %22 = vst.msk [vmem:[#allocation2] sm:$0xff] %vm21, 0.0
    %23 = vst.msk [vmem:[#allocation3] sm:$0xff] %vm21, 0.0
    %24 = vst.msk [vmem:[#allocation4] sm:$0xff] %vm21, 0.0
  $region21: #{tpu_custom_call.1} parent=0 // pred_fallthru
    _
  %v25 = vld [vmem:[%s2] sm:$0xff]
  %v26 = vld [vmem:[%s3] sm:$0xff]
  %v27 = vld [vmem:[%s3 + $0x8] sm:$0xff]
  %v28 = vld [vmem:[%s3 + $0x10] sm:$0xff]
  %v29 = vld [vmem:[%s3 + $0x18] sm:$0xff]
  %v30 = vld [vmem:[%s3 + $0x20] sm:$0xff]
  %v31 = vld [vmem:[%s3 + $0x28] sm:$0xff]
  %v32 = vld [vmem:[%s3 + $0x30] sm:$0xff]
  %v33 = vld [vmem:[%s3 + $0x38] sm:$0xff]
  %v34 = vld [vmem:[%s3 + $0x40] sm:$0xff]
  %v35 = vld [vmem:[%s3 + $0x48] sm:$0xff]
  %v36 = vld [vmem:[%s3 + $0x50] sm:$0xff]
  %v37 = vld [vmem:[%s3 + $0x58] sm:$0xff]
  %v38 = vld [vmem:[%s3 + $0x60] sm:$0xff]
  %v39 = vld [vmem:[%s3 + $0x68] sm:$0xff]
  %v40 = vld [vmem:[%s3 + $0x70] sm:$0xff]
  %v41 = vld [vmem:[%s3 + $0x78] sm:$0xff]
  %vm42 = vcmask 261120
  %v44 = vsel %vm42, %v25, 0
  %v47 = vsel %vm42, %v26, 0
  %v50 = vsel %vm42, %v27, 0
  %v53 = vsel %vm42, %v28, 0
  %v56 = vsel %vm42, %v29, 0
  %v59 = vsel %vm42, %v30, 0
  %v62 = vsel %vm42, %v31, 0
  %v65 = vsel %vm42, %v32, 0
  %v68 = vsel %vm42, %v33, 0
  %v71 = vsel %vm42, %v34, 0
  %v74 = vsel %vm42, %v35, 0
  %v77 = vsel %vm42, %v36, 0
  %v80 = vsel %vm42, %v37, 0
  %v83 = vsel %vm42, %v38, 0
  %v86 = vsel %vm42, %v39, 0
  %v89 = vsel %vm42, %v40, 0
  %v92 = vsel %vm42, %v41, 0
  %94 = vmatprep.subr.mxu0 0.0
  %95 = vmatpush1.xpose.msra.mxu0 %v47
  %96 = vmatprep.subr.mxu0 0.0
  %97 = vmatpush1.xpose.msra.mxu0 %v50
  %98 = vmatprep.subr.mxu0 0.0
  %99 = vmatpush1.xpose.msra.mxu0 %v53
  %100 = vmatprep.subr.mxu0 0.0
  %101 = vmatpush1.xpose.msra.mxu0 %v56
  %102 = vmatprep.subr.mxu0 0.0
  %103 = vmatpush1.xpose.msra.mxu0 %v59
  %104 = vmatprep.subr.mxu0 0.0
  %105 = vmatpush1.xpose.msra.mxu0 %v62
  %106 = vmatprep.subr.mxu0 0.0
  %107 = vmatpush1.xpose.msra.mxu0 %v65
  %108 = vmatprep.subr.mxu0 0.0
  %109 = vmatpush1.xpose.msra.mxu0 %v68
  %110 = vmatprep.subr.mxu0 0.0
  %111 = vmatpush1.xpose.msra.mxu0 %v71
  %112 = vmatprep.subr.mxu0 0.0
  %113 = vmatpush1.xpose.msra.mxu0 %v74
  %114 = vmatprep.subr.mxu0 0.0
  %115 = vmatpush1.xpose.msra.mxu0 %v77
  %116 = vmatprep.subr.mxu0 0.0
  %117 = vmatpush1.xpose.msra.mxu0 %v80
  %118 = vmatprep.subr.mxu0 0.0
  %119 = vmatpush1.xpose.msra.mxu0 %v83
  %120 = vmatprep.subr.mxu0 0.0
  %121 = vmatpush1.xpose.msra.mxu0 %v86
  %122 = vmatprep.subr.mxu0 0.0
  %123 = vmatpush1.xpose.msra.mxu0 %v89
  %124 = vmatprep.subr.mxu0 0.0
  %125 = vmatpush1.xpose.msra.mxu0 %v92
  %126 = vmatprep.subr.mxu0 0.0
  %127 = vmatpush1.xpose.msra.mxu0 0.0
  %128 = vmatprep.subr.mxu0 0.0
  %129 = vmatpush1.xpose.msra.mxu0 0.0
  %130 = vmatprep.subr.mxu0 0.0
  %131 = vmatpush1.xpose.msra.mxu0 0.0
  %132 = vmatprep.subr.mxu0 0.0
  %133 = vmatpush1.xpose.msra.mxu0 0.0
  %134 = vmatprep.subr.mxu0 0.0
  %135 = vmatpush1.xpose.msra.mxu0 0.0
  %136 = vmatprep.subr.mxu0 0.0
  %137 = vmatpush1.xpose.msra.mxu0 0.0
  %138 = vmatprep.subr.mxu0 0.0
  %139 = vmatpush1.xpose.msra.mxu0 0.0
  %140 = vmatprep.subr.mxu0 0.0
  %141 = vmatpush1.xpose.msra.mxu0 0.0
  %142 = vmatprep.subr.mxu0 0.0
  %143 = vmatpush1.xpose.msra.mxu0 0.0
  %144 = vmatprep.subr.mxu0 0.0
  %145 = vmatpush1.xpose.msra.mxu0 0.0
  %146 = vmatprep.subr.mxu0 0.0
  %147 = vmatpush1.xpose.msra.mxu0 0.0
  %148 = vmatprep.subr.mxu0 0.0
  %149 = vmatpush1.xpose.msra.mxu0 0.0
  %150 = vmatprep.subr.mxu0 0.0
  %151 = vmatpush1.xpose.msra.mxu0 0.0
  %152 = vmatprep.subr.mxu0 0.0
  %153 = vmatpush1.xpose.msra.mxu0 0.0
  %154 = vmatprep.subr.mxu0 0.0
  %155 = vmatpush1.xpose.msra.mxu0 0.0
  %156 = vmatprep.subr.mxu0 0.0
  %157 = vmatpush1.xpose.msra.mxu0 0.0
  %158 = vmatprep.mubr.f32.mxu0 0.0
  %159 = vmatmul.mubr.f32.gmra.mrb[0].mxu0 %v44
  %v160 = vpop.f32.mrb[0].mxu0
  %v161 = vadd.f32 0.0, %v160
  %v162 = vpop.f32.mrb[0].mxu0
  %163 = vdwg.mxu0
  %v164 = vmul.f32 %v161, 0.99999
  %v165 = vsub.f32 1.0, %v164
  %v166 = vadd.f32 %v164, 1.0
  %v167 = vmul.f32 %v165, %v166
  %v168 = vrsqrt.pop %v167
  %v169 = vmul.f32 %v167, %v168
  %vm170 = vcmp.eq.f32.partialorder %v167, inf
  %v171 = vsel %vm170, %v167, %v169
  %vm172 = vcmp.eq.f32.partialorder %v167, 0.0
  %v173 = vand.u32 %v167, 2147483648
  %v174 = vsel %vm172, %v173, %v171
  %v175 = vand.u32 2147483647, %v164
  %v176 = vand.u32 2147483647, %v174
  %v177 = vmin.f32 %v175, %v176
  %v178 = vmax.f32 %v175, %v176
  %v179 = vrcp.pop %v178
  %v180 = vmul.f32 %v177, %v179
  %v181 = vmul.f32 %v180, %v180
  %v182 = vmul.f32 0.002785687, %v181
  %v183 = vadd.f32 %v182, -0.015866
  %v184 = vmul.f32 %v183, %v181
  %v185 = vadd.f32 %v184, 0.04247222
  %v186 = vmul.f32 %v185, %v181
  %v187 = vadd.f32 %v186, -0.074975304
  %v188 = vmul.f32 %v187, %v181
  %v189 = vadd.f32 %v188, 0.1064488
  %v190 = vmul.f32 %v189, %v181
  %v191 = vadd.f32 %v190, -0.14207031
  %v192 = vmul.f32 %v191, %v181
  %v193 = vadd.f32 %v192, 0.19993454
  %v194 = vmul.f32 %v193, %v181
  %v195 = vadd.f32 %v194, -0.33333147
  %v196 = vmul.f32 %v195, %v181
  %v197 = vmul.f32 %v196, %v180
  %v198 = vadd.f32 %v197, %v180
  %vm199 = vcmp.gt.f32.partialorder %v176, %v175
  %v200 = vsub.f32 1.5707964, %v198
  %v201 = vsel %vm199, %v200, %v198
  %vm202 = vcmp.lt.f32.partialorder %v164, 0.0
  %v203 = vsub.f32 3.1415927, %v201
  %v204 = vsel %vm202, %v203, %v201
  %vm205 = vcmp.lt.s32.totalorder %v164, 0
  %v206 = vsel %vm205, 3.1415927, 0.0
  %vm207 = vcmp.eq.f32.partialorder %v174, 0.0
  %v208 = vsel %vm207, %v206, %v204
  %vm209 = vcmp.ne.f32.partialorder %v164, %v164
  %vm210 = vcmp.ne.f32.partialorder %v174, %v174
  %vm211 = vmor %vm209, %vm210
  %v212 = vsel %vm211, nan, %v208
  %vm213 = vcmp.lt.f32.partialorder %v164, 0.0
  %v214 = vsel %vm213, 2.3561945, 0.7853982
  %vm215 = vcmp.eq.s32.totalorder %v175, inf
  %vm216 = vcmp.eq.s32.totalorder %v176, inf
  %vm217 = vmand %vm215, %vm216
  %v218 = vsel %vm217, %v214, %v212
  %v219 = vand.u32 2147483647, %v218
  %v220 = vand.u32 %v174, 2147483648
  %v221 = vor.u32 %v219, %v220
  %s222 = smul.u32 0, 8
  %v223 = vlaneseq
  %v224 = vshrl.u32 %v223, 7
  %v225 = vstv %s222
  %v226 = vadd.s32 %v225, %v224
  %s227 = smul.u32 0, 128
  %v228 = vlaneseq
  %v229 = vand.u32 %v228, 127
  %v230 = vstv %s227
  %v231 = vadd.s32 %v230, %v229
  %vm232 = vcmp.ne.s32.totalorder %v226, %v231
  %vm233 = vcmp.lt.s32.totalorder %v231, 8
  %vm234 = vmand %vm232, %vm233
  %v235 = vld [vmem:[%s0] sm:$0xff]
  %v236 = vld [vmem:[%s1] sm:$0x1]
  %237 = vset.pattern.permute.xlu0 0
  %238 = vperm.xlu0 %237, %v235
  %v239 = vpop.permute.xlu0 %238
  %v240 = vlaneseq
  %v241 = vshrl.u32 %v240, 7
  %v242 = vsub.s32 0, %v241
  %v243 = vrot.slane %v236, %v242
  %vm244 = vcmp.eq.s32.totalorder %v239, %v243
  %vm245 = vmand %vm244, %vm234
  %v246 = vmul.f32 %v221, -9.094568
  %v247 = vsel %vm245, 1, 0
  %v248 = vcvt.s32.f32 %v247
  %v249 = vmul.f32 %v246, 1.442695
  %v250 = vpow.pop %v249
  %v251 = vsel %vm234, %v250, 0.0
  %v252 = vld [vmem:[#allocation2] sm:$0xff]
  %253 = vadd.xlane.f32.xlu0 %v251
  %v254 = vpop.xlane.xlu0 %253
  %v255 = vadd.f32 %v252, %v254
  %vm256 = vcmask 7168
  %257 = vst.msk [vmem:[#allocation2] sm:$0xff] %vm256, %v255
  %v258 = vld [vmem:[#allocation3] sm:$0xff]
  %v259 = vmul.f32 %v248, %v246
  %260 = vadd.xlane.f32.xlu0 %v259
  %v261 = vpop.xlane.xlu0 %260
  %v262 = vadd.f32 %v258, %v261
  %263 = vst.msk [vmem:[#allocation3] sm:$0xff] %vm256, %v262
  %v264 = vld [vmem:[#allocation4] sm:$0xff]
  %265 = vadd.xlane.f32.xlu0 %v248
  %v266 = vpop.xlane.xlu0 %265
  %v267 = vadd.f32 %v264, %v266
  %268 = vst.msk [vmem:[#allocation4] sm:$0xff] %vm256, %v267
  // Predicated region
  $region22: #{tpu_custom_call.1} parent=0 // pred_check
    %p269 = pneg %p17
  $region23: #{tpu_custom_call.1} parent=0 // pred_check_branch
    %271 = sbr.rel (%p269) target = $region25
  $region24: #{tpu_custom_call.1} parent=0 // pred_region
    %v272 = vld [vmem:[#allocation4] sm:$0xff]
    %v273 = vld [vmem:[#allocation3] sm:$0xff]
    %v274 = vld [vmem:[#allocation2] sm:$0xff]
    %v275 = vlog2.pop %v274
    %v276 = vmul.f32 %v275, 0.6931472
    %v277 = vmul.f32 %v272, %v276
    %v278 = vsub.f32 %v273, %v277
    %v279 = vrcp.pop %v272
    %v280 = vmul.f32 %v278, %v279
    %v281 = vmul.f32 %v280, -1.0
    %vm282 = vcmp.lt.s32.totalorder %v226, 8
    %v283 = vsel %vm282, %v281, 0.0
    %284 = vst.msk [vmem:[%s4] sm:$0xff] %vm256, %v283
  $region25: #{tpu_custom_call.1} parent=0 // pred_fallthru
    _
  // Predicated region
  $region26: #{tpu_custom_call.1} parent=0 // pred_check
    _
  $region27: #{tpu_custom_call.1} parent=0 // pred_check_branch
    %286 = sbr.rel (0) target = $region29
  $region28: #{tpu_custom_call.1} parent=0 // pred_region
    _
  $region29: #{tpu_custom_call.1} parent=0 // pred_fallthru
    _
  // Predicated region
  $region30: #{tpu_custom_call.1} parent=0 // pred_check
    _
  $region31: #{tpu_custom_call.1} parent=0 // pred_check_branch
    %288 = sbr.rel (0) target = $region33
  $region32: #{tpu_custom_call.1} parent=0 // pred_region
    _
  $region33: #{tpu_custom_call.1} parent=0 // pred_fallthru
    _

</llo_original>
